<compile_context>
chip_gen: v7x
topology: tpu7x:2x2x1
jax: 0.10.0
libtpu: 0.0.40
codegen_flags: <defaults>
</compile_context>

<pallas_src>
import jax
import jax.numpy as jnp
from jax.experimental import pallas as pl
from jax.experimental.pallas import tpu as pltpu  # noqa: F401  (TPU backend)

IN_FEATURES = 16
OUT_FEATURES = 32
K = 8
BATCH = 4


# ---------------------------------------------------------------- kernel -----
def _autoreg_matmul_kernel(x_ref, w_ref, b_ref, o_ref):
    # x:(B, Kin)  w:(Kin, k*out)  b:(1, k*out)  o:(B, k*out)
    o_ref[...] = (
        jnp.dot(x_ref[...], w_ref[...], preferred_element_type=jnp.float32)
        + b_ref[...]
    )


def _fused_matmul(x2d, w2d, b_row):
    """Single grid-free pallas_call: (B, Kin) @ (Kin, N) + (1, N) -> (B, N)."""
    B, kin = x2d.shape
    _, n = w2d.shape
    return pl.pallas_call(
        _autoreg_matmul_kernel,
        out_shape=jax.ShapeDtypeStruct((B, n), jnp.float32),
        in_specs=[
            pl.BlockSpec((B, kin), lambda: (0, 0)),
            pl.BlockSpec((kin, n), lambda: (0, 0)),
            pl.BlockSpec((1, n), lambda: (0, 0)),
        ],
        out_specs=pl.BlockSpec((B, n), lambda: (0, 0)),
    )(x2d, w2d, b_row)


# --------------------------------------------------------------- wrappers ----
def autoreg_forward(x, weight, bias, mask, mask_type="A"):
    in_f, out_f = weight.shape
    k = mask.shape[0]
    B = x.shape[0]

    # bias tiled along k so it can be added lane-dense inside the kernel:
    # b_row[0, kk*out + o] = bias[o]
    b_row = jnp.tile(bias.astype(jnp.float32), k).reshape(1, k * out_f)

    if mask_type == "A":
        # masked weight stack -> (in, k*out): wm[i, kk*out+o] = w[i,o]*mask[kk,i,o]
        wm = jnp.transpose(weight[None, ...] * mask, (1, 0, 2))
        wm = wm.reshape(in_f, k * out_f).astype(jnp.float32)
        x2d = x.astype(jnp.float32)                          # (B, in)
        out2d = _fused_matmul(x2d, wm, b_row)                # (B, k*out)
    else:
        # block-diagonal weight: wbig[i*k+kk', kk*out+o] = w[i,o] * (kk'==kk)
        eye_k = jnp.eye(k, dtype=jnp.float32)
        wbig = (weight.astype(jnp.float32)[:, None, None, :]
                * eye_k[None, :, :, None]).reshape(in_f * k, k * out_f)
        # row-major flatten of trailing dims -> free bitcast, no transpose glue
        x2d = x.astype(jnp.float32).reshape(B, in_f * k)     # (B, in*k)
        out2d = _fused_matmul(x2d, wbig, b_row)              # (B, k*out)

    # (B, k*out) -> (B, k, out) -> (B, out, k)
    # matches torch: permute(1,2,0) (A) / transpose(-2,-1) (B) + bias[None,:,None]
    return jnp.transpose(out2d.reshape(B, k, out_f), (0, 2, 1))


autoreg_forward_jit = jax.jit(autoreg_forward, static_argnames="mask_type")


# --------------------------------------------------------- params / ref ------
def init_params(key, in_f, out_f, k, mask_type="A"):
    # Xavier normal (gain=1): std = sqrt(2 / (fan_in + fan_out)); bias = 0.
    std = (2.0 / (in_f + out_f)) ** 0.5
    weight = std * jax.random.normal(key, (in_f, out_f), dtype=jnp.float32)
    bias = jnp.zeros((out_f,), dtype=jnp.float32)
    if mask_type == "A":
        i_idx = jnp.arange(k)[:, None]
        j_idx = jnp.arange(in_f)[None, :]
        # torch: mask[i, i+1:, :] = 0 for i in range(k-1); last slice stays ones.
        m2d = ((j_idx <= i_idx) | (i_idx == k - 1)).astype(jnp.float32)
        mask = jnp.broadcast_to(m2d[:, :, None], (k, in_f, out_f)).astype(jnp.float32)
    else:
        mask = jnp.ones((k, in_f, out_f), dtype=jnp.float32)
    return weight, bias, mask


def autoreg_reference(x, weight, bias, mask, mask_type="A"):
    if mask_type == "A":
        w = weight[None, ...] * mask                         # (k, in, out)
        xw = jnp.einsum("bi,kio->kbo", x, w)                 # torch.matmul(x, w)
        xw = jnp.transpose(xw, (1, 2, 0))                    # permute(1, 2, 0)
    else:
        xx = jnp.swapaxes(x, -2, -1)
        xw = jnp.matmul(xx, weight)
        xw = jnp.swapaxes(xw, -2, -1)
    return xw + bias[None, :, None]


# ------------------------------------------------------------------ main -----
if __name__ == "__main__":
    key = jax.random.PRNGKey(0)
    k_w, k_xa, k_xb = jax.random.split(key, 3)

    # mask_type = 'A' (default in the module): x is (B, in_features)
    w_a, b_a, m_a = init_params(k_w, IN_FEATURES, OUT_FEATURES, K, "A")
    x_a = jax.random.normal(k_xa, (BATCH, IN_FEATURES), dtype=jnp.float32)
    out_a = jax.block_until_ready(autoreg_forward_jit(x_a, w_a, b_a, m_a, mask_type="A"))
    ref_a = autoreg_reference(x_a, w_a, b_a, m_a, "A")
    assert out_a.shape == (BATCH, OUT_FEATURES, K)
    assert jnp.allclose(out_a, ref_a, atol=1e-5, rtol=1e-5)

    # mask_type = 'B': x is (B, in_features, k)
    w_b, b_b, m_b = init_params(k_w, IN_FEATURES, OUT_FEATURES, K, "B")
    x_b = jax.random.normal(k_xb, (BATCH, IN_FEATURES, K), dtype=jnp.float32)
    out_b = jax.block_until_ready(autoreg_forward_jit(x_b, w_b, b_b, m_b, mask_type="B"))
    ref_b = autoreg_reference(x_b, w_b, b_b, m_b, "B")
    assert out_b.shape == (BATCH, OUT_FEATURES, K)
    assert jnp.allclose(out_b, ref_b, atol=1e-5, rtol=1e-5)

    print("KERNEL_OK")
</pallas_src>

<mosaic_0001>
module attributes {stable_mosaic.version = 11 : i64} {
  func.func @_autoreg_matmul_kernel(%arg0: memref<4x16xf32, #tpu.memory_space<vmem>>, %arg1: memref<16x256xf32, #tpu.memory_space<vmem>>, %arg2: memref<1x256xf32, #tpu.memory_space<vmem>>, %arg3: memref<4x256xf32, #tpu.memory_space<vmem>>) attributes {dimension_semantics = [], scalar_prefetch = 0 : i64, scratch_operands = 0 : i64, tpu.core_type = #tpu.core_type<tc>} {
    %c0 = arith.constant 0 : index
    %c0_0 = arith.constant 0 : index
    %0 = vector.load %arg0[%c0, %c0_0] : memref<4x16xf32, #tpu.memory_space<vmem>>, vector<4x16xf32>
    %c0_1 = arith.constant 0 : index
    %c0_2 = arith.constant 0 : index
    %1 = vector.load %arg1[%c0_1, %c0_2] : memref<16x256xf32, #tpu.memory_space<vmem>>, vector<16x256xf32>
    %cst = arith.constant dense<0.000000e+00> : vector<4x256xf32>
    %2 = tpu.matmul %0, %1, %cst {dimension_numbers = #tpu.dot_dimension_numbers<[1], [0], [0], [1], [0, 0, 1, 1], [], []>} : vector<4x16xf32>, vector<16x256xf32>, vector<4x256xf32> -> vector<4x256xf32>
    %c0_3 = arith.constant 0 : index
    %c0_4 = arith.constant 0 : index
    %3 = vector.load %arg2[%c0_3, %c0_4] : memref<1x256xf32, #tpu.memory_space<vmem>>, vector<1x256xf32>
    %4 = vector.broadcast %3 : vector<1x256xf32> to vector<4x256xf32>
    %5 = arith.addf %2, %4 : vector<4x256xf32>
    %c0_5 = arith.constant 0 : index
    %c0_6 = arith.constant 0 : index
    %6 = vector.load %arg3[%c0_5, %c0_6] : memref<4x256xf32, #tpu.memory_space<vmem>>, vector<4x256xf32>
    tpu.vector_store %arg3[%c0_5, %c0_6], %5 {strides = array<i32>} : memref<4x256xf32, #tpu.memory_space<vmem>>, vector<4x256xf32>,
    return
  }
}

</mosaic_0001>

<llo_original>
// kernel: tile.8
$region0: #{tile.8}
  #allocation0 [shape = 's32[1]{0}', space=sflag, size = 0x4, scoped, tag = 'scoped memory for tile.8']
  %s0 = inlined_call_operand.vmem [shape: f32[32], index: 0, kind: input, shape index: {}]
  %s1 = inlined_call_operand.vmem [shape: f32[8,32], index: 1, kind: output, shape index: {}]
  // Predicated region
  $region2: #{tile.8} parent=0 // pred_check
    _
  $region3: #{tile.8} parent=0 // pred_check_branch
    %3 = sbr.rel (0) target = $region5
  $region4: #{tile.8} parent=0 // pred_region
    _
  $region5: #{tile.8} parent=0 // pred_fallthru
    _
  %v4 = vld [vmem:[%s0] ss:$0 sm:$0xff]
  %5 = vst [vmem:[%s1] sm:$0xff] %v4

// kernel: tile.9
$region0: #{tile.9}
  %s0 = inlined_call_operand.vmem [shape: f32[8,32], index: 0, kind: input, shape index: {}]
  %s1 = inlined_call_operand.vmem [shape: f32[1,256], index: 1, kind: output, shape index: {}]
  $region1: #{tile.9} parent=0
    #allocation0 [shape = 'u8[8192]{0}', space=vmem, size = 0x2000, scoped, tag = 'scoped mem for output reshape']
    %s2 = smov 3
    %v3 = vld [vmem:[%s0] ss:$4 sm:%s2]
    %vm4 = vcmask 261120
    %5 = vst.msk [vmem:[#allocation0] ss:$8 sm:$0x3] %vm4, %v3
    %s6 = scalar_lea.vmem %s0, 3
    %s7 = smov 3
    %v8 = vld [vmem:[%s6] ss:$4 sm:%s7]
    %9 = vrot.lane.b32.xlu0 %v8, 96
    %v10 = vpop.permute.xlu0 %9
    %vm11 = vcmask 1048320
    %12 = vst.msk [vmem:[#allocation0] ss:$8 sm:$0x3] %vm11, %v10
    %s13 = scalar_lea.vmem %s0, 2
    %s14 = smov 3
    %v15 = vld [vmem:[%s13] ss:$4 sm:%s14]
    %16 = vrot.lane.b32.xlu0 %v15, 64
    %v17 = vpop.permute.xlu0 %16
    %vm18 = vcmask 785920
    %19 = vst.msk [vmem:[#allocation0] ss:$8 sm:$0x3] %vm18, %v17
    %s20 = scalar_lea.vmem %s0, 1
    %s21 = smov 3
    %v22 = vld [vmem:[%s20] ss:$4 sm:%s21]
    %23 = vrot.lane.b32.xlu0 %v22, 32
    %v24 = vpop.permute.xlu0 %23
    %vm25 = vcmask 523520
    %26 = vst.msk [vmem:[#allocation0] ss:$8 sm:$0x3] %vm25, %v24
    %s28 = sshllo.u32 0, 1
    %v30 = vld [vmem:[#allocation0] sm:%s28]
    %s31 = sshllo.u32 0, 1
    %32 = vst [vmem:[%s1] sm:%s31] %v30
    %s33 = scalar_lea.vmem [#allocation0], 8
    %v34 = vld [vmem:[%s33] sm:%s28]
    %s35 = sshllo.u32 0, 1
    %s36 = scalar_lea.vmem %s1, 1
    %37 = vst [vmem:[%s36] sm:%s35] %v34

// kernel: autoreg_forward.1
$region0: #{autoreg_forward.1}
  #allocation0 [shape = 'u32[]', space=smem, size = 0x4, offset = 0x4, fixed_abs, tag = 'smem constant byte address 0x4 - core index']
  #allocation1 [shape = 'u32[144,128]{1,0:T(1,128)}', space=vmem, size = 0x12000, scoped, tag = 'internal scratch']
  %s0 = inlined_call_operand.vmem [shape: f32[4,16], index: 0, kind: input, shape index: {}]
  %s1 = inlined_call_operand.vmem [shape: f32[16,256], index: 1, kind: input, shape index: {}]
  %s2 = inlined_call_operand.vmem [shape: f32[1,256], index: 2, kind: input, shape index: {}]
  %s3 = inlined_call_operand.vmem [shape: f32[4,256], index: 3, kind: output, shape index: {}]
  %s4 = sld [smem:[#allocation0]]
  $region22: #{autoreg_forward.1} parent=0
    _
  %s6 = ssub.s32 1, %s4
  %s7 = scalar_select 0, %s6, %s4
  // Predicated region
  $region2: #{autoreg_forward.1} parent=0 // pred_check
    _
  $region3: #{autoreg_forward.1} parent=0 // pred_check_branch
    %9 = sbr.rel (0) target = $region5
  $region4: #{autoreg_forward.1} parent=0 // pred_region
    _
  $region5: #{autoreg_forward.1} parent=0 // pred_fallthru
    _
  // Predicated region
  $region6: #{autoreg_forward.1} parent=0 // pred_check
    _
  $region7: #{autoreg_forward.1} parent=0 // pred_check_branch
    %11 = sbr.rel (0) target = $region9
  $region8: #{autoreg_forward.1} parent=0 // pred_region
    _
  $region9: #{autoreg_forward.1} parent=0 // pred_fallthru
    _
  // Predicated region
  $region10: #{autoreg_forward.1} parent=0 // pred_check
    _
  $region11: #{autoreg_forward.1} parent=0 // pred_check_branch
    %13 = sbr.rel (0) target = $region13
  $region12: #{autoreg_forward.1} parent=0 // pred_region
    _
  $region13: #{autoreg_forward.1} parent=0 // pred_fallthru
    _
  %v14 = vld [vmem:[%s0] sm:$0xf]
  %v15 = vld [vmem:[%s1] sm:$0xff]
  %v16 = vld [vmem:[%s1 + $0x8] sm:$0xff]
  %v17 = vld [vmem:[%s1 + $0x10] sm:$0xff]
  %v18 = vld [vmem:[%s1 + $0x18] sm:$0xff]
  %v19 = vld [vmem:[%s2] sm:$0x3]
  %v21 = vlaneseq
  %v22 = vshrl.u32 %v21, 7
  %v23 = vsub.s32 0, %v22
  %v24 = vrot.slane %v19, %v23
  %v25 = vlaneseq
  %v26 = vshrl.u32 %v25, 7
  %v27 = vsub.s32 1, %v26
  %v28 = vrot.slane %v19, %v27
  %vm31 = vcmask 130048
  %v33 = vsel %vm31, %v14, 0
  %35 = vmatprep.subr.mxu0 %v16
  %36 = vmatpush1.msra.mxu0 %v15
  %37 = vmatprep.subr.mxu0 %v18
  %38 = vmatpush1.msra.mxu0 %v17
  %39 = vmatprep.subr.mxu0 0.0
  %40 = vmatpush1.msra.mxu0 0.0
  %41 = vmatprep.subr.mxu0 0.0
  %42 = vmatpush1.msra.mxu0 0.0
  %43 = vmatprep.subr.mxu0 0.0
  %44 = vmatpush1.msra.mxu0 0.0
  %45 = vmatprep.subr.mxu0 0.0
  %46 = vmatpush1.msra.mxu0 0.0
  %47 = vmatprep.subr.mxu0 0.0
  %48 = vmatpush1.msra.mxu0 0.0
  %49 = vmatprep.subr.mxu0 0.0
  %50 = vmatpush1.msra.mxu0 0.0
  %51 = vmatprep.subr.mxu0 0.0
  %52 = vmatpush1.msra.mxu0 0.0
  %53 = vmatprep.subr.mxu0 0.0
  %54 = vmatpush1.msra.mxu0 0.0
  %55 = vmatprep.subr.mxu0 0.0
  %56 = vmatpush1.msra.mxu0 0.0
  %57 = vmatprep.subr.mxu0 0.0
  %58 = vmatpush1.msra.mxu0 0.0
  %59 = vmatprep.subr.mxu0 0.0
  %60 = vmatpush1.msra.mxu0 0.0
  %61 = vmatprep.subr.mxu0 0.0
  %62 = vmatpush1.msra.mxu0 0.0
  %63 = vmatprep.subr.mxu0 0.0
  %64 = vmatpush1.msra.mxu0 0.0
  %65 = vmatprep.subr.mxu0 0.0
  %66 = vmatpush1.msra.mxu0 0.0
  %67 = vmatprep.subr.mxu0 0.0
  %68 = vmatpush1.msra.mxu0 0.0
  %69 = vmatprep.subr.mxu0 0.0
  %70 = vmatpush1.msra.mxu0 0.0
  %71 = vmatprep.subr.mxu0 0.0
  %72 = vmatpush1.msra.mxu0 0.0
  %73 = vmatprep.subr.mxu0 0.0
  %74 = vmatpush1.msra.mxu0 0.0
  %75 = vmatprep.subr.mxu0 0.0
  %76 = vmatpush1.msra.mxu0 0.0
  %77 = vmatprep.subr.mxu0 0.0
  %78 = vmatpush1.msra.mxu0 0.0
  %79 = vmatprep.subr.mxu0 0.0
  %80 = vmatpush1.msra.mxu0 0.0
  %81 = vmatprep.subr.mxu0 0.0
  %82 = vmatpush1.msra.mxu0 0.0
  %83 = vmatprep.subr.mxu0 0.0
  %84 = vmatpush1.msra.mxu0 0.0
  %85 = vmatprep.subr.mxu0 0.0
  %86 = vmatpush1.msra.mxu0 0.0
  %87 = vmatprep.subr.mxu0 0.0
  %88 = vmatpush1.msra.mxu0 0.0
  %89 = vmatprep.subr.mxu0 0.0
  %90 = vmatpush1.msra.mxu0 0.0
  %91 = vmatprep.subr.mxu0 0.0
  %92 = vmatpush1.msra.mxu0 0.0
  %93 = vmatprep.subr.mxu0 0.0
  %94 = vmatpush1.msra.mxu0 0.0
  %95 = vmatprep.subr.mxu0 0.0
  %96 = vmatpush1.msra.mxu0 0.0
  %97 = vmatprep.subr.mxu0 0.0
  %98 = vmatpush1.msra.mxu0 0.0
  %99 = vmatprep.mubr.f32.mxu0 0.0
  %100 = vmatmul.mubr.f32.gmra.mrb[0].mxu0 %v33
  %v101 = vpop.f32.mrb[0].mxu0
  %v102 = vadd.f32 %v24, %v101
  %v103 = vpop.f32.mrb[0].mxu0
  %v104 = vadd.f32 %v28, %v103
  %105 = vdwg.mxu0
  %v108 = vcombine.low %v102, %v104
  %110 = vst [vmem:[%s3] sm:$0xff] %v108
  // Predicated region
  $region14: #{autoreg_forward.1} parent=0 // pred_check
    _
  $region15: #{autoreg_forward.1} parent=0 // pred_check_branch
    %112 = sbr.rel (0) target = $region17
  $region16: #{autoreg_forward.1} parent=0 // pred_region
    _
  $region17: #{autoreg_forward.1} parent=0 // pred_fallthru
    _
  // Predicated region
  $region18: #{autoreg_forward.1} parent=0 // pred_check
    _
  $region19: #{autoreg_forward.1} parent=0 // pred_check_branch
    %114 = sbr.rel (0) target = $region21
  $region20: #{autoreg_forward.1} parent=0 // pred_region
    _
  $region21: #{autoreg_forward.1} parent=0 // pred_fallthru
    _

</llo_original>
